<compile_context>
chip_gen: v6e
topology: v6e:2x2x1
jax: 0.10.0
libtpu: 0.0.40
codegen_flags: <defaults>
</compile_context>

<pallas_src>
import functools

import jax
import jax.numpy as jnp
from jax import lax
from jax.experimental import pallas as pl
from jax.experimental.pallas import tpu as pltpu

IN_FEATURES = 2
HIDDEN = 8
NEG_SLOPE = 0.01          # PyTorch nn.LeakyReLU default
LANES = 128               # vreg lane width
SUBLANES = 8              # f32 vreg sublane count


def xor_mlp_kernel(x_ref, w1_ref, b1_ref, nw2_ref, nb2_ref, o_ref, *, compute_dtype):
    # x_ref  : (2, tr, 128) VMEM -- features x (sublane-dense batch rows) x lanes
    # w1_ref : (16,) SMEM -- flattened w1: [0:8] weights for feature 0, [8:16] feature 1
    # b1_ref : (8,)  SMEM
    # nw2_ref: (8,)  SMEM -- pre-negated second-layer weights (-w2)
    # nb2_ref: (1,)  SMEM -- pre-negated second-layer bias    (-b2)
    # o_ref  : (tr, 128) VMEM
    tr = x_ref.shape[1]
    chunk = SUBLANES if tr % SUBLANES == 0 else tr   # one f32 vreg of rows per step
    n_chunks = tr // chunk
    cd = compute_dtype

    # Hoist the tiny scalar weights out of the chunk loop (SMEM -> sregs once).
    w1a = [w1_ref[j].astype(cd) for j in range(HIDDEN)]
    w1b = [w1_ref[HIDDEN + j].astype(cd) for j in range(HIDDEN)]
    b1s = [b1_ref[j].astype(cd) for j in range(HIDDEN)]
    nw2 = [nw2_ref[j].astype(cd) for j in range(HIDDEN)]
    nb2 = nb2_ref[0].astype(cd)

    def body(c, carry):
        r = pl.multiple_of(c * chunk, chunk)
        x0 = x_ref[0, pl.ds(r, chunk), :].astype(cd)      # (chunk, 128)
        x1 = x_ref[1, pl.ds(r, chunk), :].astype(cd)
        acc = jnp.full(x0.shape, nb2, cd)                 # acc accumulates -(w2.h + b2)
        for j in range(HIDDEN):                           # statically unrolled VPU FMAs
            h = w1a[j] * x0 + w1b[j] * x1 + b1s[j]
            h = jnp.maximum(h, NEG_SLOPE * h)             # LeakyReLU (one VPU max)
            acc = acc + nw2[j] * h
        # sigmoid(y) = 1/(1 + exp(-y)) = 1/(1 + exp(acc)); exp + recip on the EUP.
        o_ref[pl.ds(r, chunk), :] = pl.reciprocal(
            1.0 + jnp.exp(acc), approx=True).astype(o_ref.dtype)
        return carry

    lax.fori_loop(0, n_chunks, body, 0, unroll=min(4, n_chunks))


def xor_forward(x, w1, b1, w2, b2, *, block_rows=1024, compute_dtype=jnp.float32):
    """Forward pass of the XOR MLP.

    x : (B, 2) float32
    w1: (2, 8) float32   [in, out]  (transposed from PyTorch's [out, in])
    b1: (8,)  float32
    w2: (8,)  float32    (out_features == 1, flattened)
    b2: (1,)  float32
    returns (B, 1) float32

    compute_dtype=jnp.bfloat16 roughly halves the binding VALU work on
    v6e/v7x; keep float32 on v5e (no bf16 VPU/EUP there).
    """
    B = x.shape[0]
    block_rows = max(SUBLANES, (block_rows // SUBLANES) * SUBLANES)

    # ---- batch layout: (B, 2) -> (2, R_pad, 128), sublane + lane dense ------
    R = pl.cdiv(B, LANES)                      # rows of 128-lane batch
    tr = min(block_rows, R)
    if R >= 2 * SUBLANES:
        # Keep >= 2 grid steps so "parallel" really splits the batch across
        # v7x's two TensorCores; keep tr sublane-aligned (multiple of 8).
        half = pl.cdiv(pl.cdiv(R, 2), SUBLANES) * SUBLANES
        tr = max(SUBLANES, min(tr, half))
    R_pad = pl.cdiv(R, tr) * tr if tr < R else R
    B_pad = R_pad * LANES
    n_blocks = R_pad // tr

    # TODO(synk): for very large B, feed x feature-major (2, R, 128) from upstream
    # (or de-interleave in-kernel via strided DMA) to avoid this wrapper-side copy.
    x_t = x.T                                  # (2, B)
    if B_pad != B:
        x_t = jnp.pad(x_t, ((0, 0), (0, B_pad - B)))
    x_3d = x_t.reshape(IN_FEATURES, R_pad, LANES)

    # Flatten w1 (dodges 2-D SMEM padding) and pre-negate the output layer.
    w1_flat = jnp.concatenate([w1[0, :], w1[1, :]]).astype(jnp.float32)   # (16,)
    b1_f = b1.astype(jnp.float32)
    nw2 = (-w2).astype(jnp.float32)
    nb2 = (-b2).astype(jnp.float32)

    smem = pl.BlockSpec(memory_space=pltpu.MemorySpace.SMEM)

    out_2d = pl.pallas_call(
        functools.partial(xor_mlp_kernel, compute_dtype=compute_dtype),
        out_shape=jax.ShapeDtypeStruct((R_pad, LANES), jnp.float32),
        grid=(n_blocks,),
        in_specs=[
            pl.BlockSpec((IN_FEATURES, tr, LANES), lambda i: (0, i, 0)),  # x (VMEM)
            smem,   # w1_flat
            smem,   # b1
            smem,   # -w2
            smem,   # -b2
        ],
        out_specs=pl.BlockSpec((tr, LANES), lambda i: (i, 0)),
        compiler_params=pltpu.CompilerParams(
            dimension_semantics=("parallel",),   # v7x: shard row-blocks across 2 TCs
        ),
    )(x_3d, w1_flat, b1_f, nw2, nb2)

    return out_2d.reshape(B_pad)[:B].reshape(B, 1)


def reference_forward(x, w1, b1, w2, b2):
    h = x @ w1 + b1
    h = jnp.maximum(h, NEG_SLOPE * h)
    return jax.nn.sigmoid(h @ w2.reshape(HIDDEN, 1) + b2)


def init_params(key):
    # Deterministic init mimicking nn.Linear's U(-1/sqrt(fan_in), 1/sqrt(fan_in)).
    k1, k2, k3, k4 = jax.random.split(key, 4)
    bound1 = 1.0 / jnp.sqrt(2.0)
    bound2 = 1.0 / jnp.sqrt(8.0)
    w1 = jax.random.uniform(k1, (2, 8), jnp.float32, -bound1, bound1)   # [in, out]
    b1 = jax.random.uniform(k2, (8,), jnp.float32, -bound1, bound1)
    w2 = jax.random.uniform(k3, (8,), jnp.float32, -bound2, bound2)     # out=1, flat
    b2 = jax.random.uniform(k4, (1,), jnp.float32, -bound2, bound2)
    return w1, b1, w2, b2


if __name__ == "__main__":
    key = jax.random.PRNGKey(0)
    kx, kx2, kp = jax.random.split(key, 3)
    w1, b1, w2, b2 = init_params(kp)

    # Small XOR-style batch (single full-extent block path).
    batch = 8
    x = jax.random.uniform(kx, (batch, 2), jnp.float32)
    out = jax.block_until_ready(xor_forward(x, w1, b1, w2, b2))
    ref = reference_forward(x, w1, b1, w2, b2)
    assert out.shape == (batch, 1)
    assert jnp.allclose(out, ref, atol=2e-3), "mismatch vs reference (small batch)"

    # Slightly larger batch to exercise the multi-block / multi-chunk pipeline.
    batch2 = 2176   # -> 17 lane-rows -> 2 grid steps of 16 padded rows
    x2 = jax.random.uniform(kx2, (batch2, 2), jnp.float32)
    out2 = jax.block_until_ready(xor_forward(x2, w1, b1, w2, b2))
    ref2 = reference_forward(x2, w1, b1, w2, b2)
    assert out2.shape == (batch2, 1)
    assert jnp.allclose(out2, ref2, atol=2e-3), "mismatch vs reference (tiled batch)"

    print("KERNEL_OK")
</pallas_src>

<mosaic_0001>
module attributes {stable_mosaic.version = 11 : i64} {
  func.func @xor_mlp_kernel(%arg0: i32, %arg1: memref<2x1x128xf32, #tpu.memory_space<vmem>>, %arg2: memref<16xf32, #tpu.memory_space<smem>>, %arg3: memref<8xf32, #tpu.memory_space<smem>>, %arg4: memref<8xf32, #tpu.memory_space<smem>>, %arg5: memref<1xf32, #tpu.memory_space<smem>>, %arg6: memref<1x128xf32, #tpu.memory_space<vmem>>) attributes {dimension_semantics = [#tpu.dimension_semantics<parallel>], iteration_bounds = array<i64: 1>, scalar_prefetch = 0 : i64, scratch_operands = 0 : i64, tpu.core_type = #tpu.core_type<tc>, window_params = [{transform_indices = @transform_0, window_bounds = array<i64: 2, 1, 128>}, {transform_indices = @transform_1, window_bounds = array<i64: 16>}, {transform_indices = @transform_2, window_bounds = array<i64: 8>}, {transform_indices = @transform_3, window_bounds = array<i64: 8>}, {transform_indices = @transform_4, window_bounds = array<i64: 1>}, {transform_indices = @transform_5, window_bounds = array<i64: 1, 128>}]} {
    %c0 = arith.constant 0 : index
    %0 = memref.load %arg2[%c0] : memref<16xf32, #tpu.memory_space<smem>>
    %c1 = arith.constant 1 : index
    %1 = memref.load %arg2[%c1] : memref<16xf32, #tpu.memory_space<smem>>
    %c2 = arith.constant 2 : index
    %2 = memref.load %arg2[%c2] : memref<16xf32, #tpu.memory_space<smem>>
    %c3 = arith.constant 3 : index
    %3 = memref.load %arg2[%c3] : memref<16xf32, #tpu.memory_space<smem>>
    %c4 = arith.constant 4 : index
    %4 = memref.load %arg2[%c4] : memref<16xf32, #tpu.memory_space<smem>>
    %c5 = arith.constant 5 : index
    %5 = memref.load %arg2[%c5] : memref<16xf32, #tpu.memory_space<smem>>
    %c6 = arith.constant 6 : index
    %6 = memref.load %arg2[%c6] : memref<16xf32, #tpu.memory_space<smem>>
    %c7 = arith.constant 7 : index
    %7 = memref.load %arg2[%c7] : memref<16xf32, #tpu.memory_space<smem>>
    %c8 = arith.constant 8 : index
    %8 = memref.load %arg2[%c8] : memref<16xf32, #tpu.memory_space<smem>>
    %c9 = arith.constant 9 : index
    %9 = memref.load %arg2[%c9] : memref<16xf32, #tpu.memory_space<smem>>
    %c10 = arith.constant 10 : index
    %10 = memref.load %arg2[%c10] : memref<16xf32, #tpu.memory_space<smem>>
    %c11 = arith.constant 11 : index
    %11 = memref.load %arg2[%c11] : memref<16xf32, #tpu.memory_space<smem>>
    %c12 = arith.constant 12 : index
    %12 = memref.load %arg2[%c12] : memref<16xf32, #tpu.memory_space<smem>>
    %c13 = arith.constant 13 : index
    %13 = memref.load %arg2[%c13] : memref<16xf32, #tpu.memory_space<smem>>
    %c14 = arith.constant 14 : index
    %14 = memref.load %arg2[%c14] : memref<16xf32, #tpu.memory_space<smem>>
    %c15 = arith.constant 15 : index
    %15 = memref.load %arg2[%c15] : memref<16xf32, #tpu.memory_space<smem>>
    %c0_0 = arith.constant 0 : index
    %16 = memref.load %arg3[%c0_0] : memref<8xf32, #tpu.memory_space<smem>>
    %c1_1 = arith.constant 1 : index
    %17 = memref.load %arg3[%c1_1] : memref<8xf32, #tpu.memory_space<smem>>
    %c2_2 = arith.constant 2 : index
    %18 = memref.load %arg3[%c2_2] : memref<8xf32, #tpu.memory_space<smem>>
    %c3_3 = arith.constant 3 : index
    %19 = memref.load %arg3[%c3_3] : memref<8xf32, #tpu.memory_space<smem>>
    %c4_4 = arith.constant 4 : index
    %20 = memref.load %arg3[%c4_4] : memref<8xf32, #tpu.memory_space<smem>>
    %c5_5 = arith.constant 5 : index
    %21 = memref.load %arg3[%c5_5] : memref<8xf32, #tpu.memory_space<smem>>
    %c6_6 = arith.constant 6 : index
    %22 = memref.load %arg3[%c6_6] : memref<8xf32, #tpu.memory_space<smem>>
    %c7_7 = arith.constant 7 : index
    %23 = memref.load %arg3[%c7_7] : memref<8xf32, #tpu.memory_space<smem>>
    %c0_8 = arith.constant 0 : index
    %24 = memref.load %arg4[%c0_8] : memref<8xf32, #tpu.memory_space<smem>>
    %c1_9 = arith.constant 1 : index
    %25 = memref.load %arg4[%c1_9] : memref<8xf32, #tpu.memory_space<smem>>
    %c2_10 = arith.constant 2 : index
    %26 = memref.load %arg4[%c2_10] : memref<8xf32, #tpu.memory_space<smem>>
    %c3_11 = arith.constant 3 : index
    %27 = memref.load %arg4[%c3_11] : memref<8xf32, #tpu.memory_space<smem>>
    %c4_12 = arith.constant 4 : index
    %28 = memref.load %arg4[%c4_12] : memref<8xf32, #tpu.memory_space<smem>>
    %c5_13 = arith.constant 5 : index
    %29 = memref.load %arg4[%c5_13] : memref<8xf32, #tpu.memory_space<smem>>
    %c6_14 = arith.constant 6 : index
    %30 = memref.load %arg4[%c6_14] : memref<8xf32, #tpu.memory_space<smem>>
    %c7_15 = arith.constant 7 : index
    %31 = memref.load %arg4[%c7_15] : memref<8xf32, #tpu.memory_space<smem>>
    %c0_16 = arith.constant 0 : index
    %32 = memref.load %arg5[%c0_16] : memref<1xf32, #tpu.memory_space<smem>>
    %c0_i32 = arith.constant 0 : i32
    %c1_i32 = arith.constant 1 : i32
    %33 = arith.muli %c0_i32, %c1_i32 : i32
    %34 = tpu.assume_multiple %33, 1 : i32
    %c0_17 = arith.constant 0 : index
    %35 = arith.index_cast %34 : i32 to index
    %c0_18 = arith.constant 0 : index
    %36 = vector.load %arg1[%c0_17, %35, %c0_18] : memref<2x1x128xf32, #tpu.memory_space<vmem>>, vector<1x1x128xf32>
    %37 = vector.shape_cast %36 : vector<1x1x128xf32> to vector<1x128xf32>
    %c1_19 = arith.constant 1 : index
    %38 = arith.index_cast %34 : i32 to index
    %c0_20 = arith.constant 0 : index
    %39 = vector.load %arg1[%c1_19, %38, %c0_20] : memref<2x1x128xf32, #tpu.memory_space<vmem>>, vector<1x1x128xf32>
    %40 = vector.shape_cast %39 : vector<1x1x128xf32> to vector<1x128xf32>
    %41 = vector.broadcast %32 : f32 to vector<1x128xf32>
    %42 = vector.broadcast %0 : f32 to vector<1x128xf32>
    %43 = arith.mulf %42, %37 : vector<1x128xf32>
    %44 = vector.broadcast %8 : f32 to vector<1x128xf32>
    %45 = arith.mulf %44, %40 : vector<1x128xf32>
    %46 = arith.addf %43, %45 : vector<1x128xf32>
    %47 = vector.broadcast %16 : f32 to vector<1x128xf32>
    %48 = arith.addf %46, %47 : vector<1x128xf32>
    %cst = arith.constant 0.00999999977 : f32
    %49 = vector.broadcast %cst : f32 to vector<1x128xf32>
    %50 = arith.mulf %49, %48 : vector<1x128xf32>
    %51 = arith.maximumf %48, %50 : vector<1x128xf32>
    %52 = vector.broadcast %24 : f32 to vector<1x128xf32>
    %53 = arith.mulf %52, %51 : vector<1x128xf32>
    %54 = arith.addf %41, %53 : vector<1x128xf32>
    %55 = vector.broadcast %1 : f32 to vector<1x128xf32>
    %56 = arith.mulf %55, %37 : vector<1x128xf32>
    %57 = vector.broadcast %9 : f32 to vector<1x128xf32>
    %58 = arith.mulf %57, %40 : vector<1x128xf32>
    %59 = arith.addf %56, %58 : vector<1x128xf32>
    %60 = vector.broadcast %17 : f32 to vector<1x128xf32>
    %61 = arith.addf %59, %60 : vector<1x128xf32>
    %cst_21 = arith.constant 0.00999999977 : f32
    %62 = vector.broadcast %cst_21 : f32 to vector<1x128xf32>
    %63 = arith.mulf %62, %61 : vector<1x128xf32>
    %64 = arith.maximumf %61, %63 : vector<1x128xf32>
    %65 = vector.broadcast %25 : f32 to vector<1x128xf32>
    %66 = arith.mulf %65, %64 : vector<1x128xf32>
    %67 = arith.addf %54, %66 : vector<1x128xf32>
    %68 = vector.broadcast %2 : f32 to vector<1x128xf32>
    %69 = arith.mulf %68, %37 : vector<1x128xf32>
    %70 = vector.broadcast %10 : f32 to vector<1x128xf32>
    %71 = arith.mulf %70, %40 : vector<1x128xf32>
    %72 = arith.addf %69, %71 : vector<1x128xf32>
    %73 = vector.broadcast %18 : f32 to vector<1x128xf32>
    %74 = arith.addf %72, %73 : vector<1x128xf32>
    %cst_22 = arith.constant 0.00999999977 : f32
    %75 = vector.broadcast %cst_22 : f32 to vector<1x128xf32>
    %76 = arith.mulf %75, %74 : vector<1x128xf32>
    %77 = arith.maximumf %74, %76 : vector<1x128xf32>
    %78 = vector.broadcast %26 : f32 to vector<1x128xf32>
    %79 = arith.mulf %78, %77 : vector<1x128xf32>
    %80 = arith.addf %67, %79 : vector<1x128xf32>
    %81 = vector.broadcast %3 : f32 to vector<1x128xf32>
    %82 = arith.mulf %81, %37 : vector<1x128xf32>
    %83 = vector.broadcast %11 : f32 to vector<1x128xf32>
    %84 = arith.mulf %83, %40 : vector<1x128xf32>
    %85 = arith.addf %82, %84 : vector<1x128xf32>
    %86 = vector.broadcast %19 : f32 to vector<1x128xf32>
    %87 = arith.addf %85, %86 : vector<1x128xf32>
    %cst_23 = arith.constant 0.00999999977 : f32
    %88 = vector.broadcast %cst_23 : f32 to vector<1x128xf32>
    %89 = arith.mulf %88, %87 : vector<1x128xf32>
    %90 = arith.maximumf %87, %89 : vector<1x128xf32>
    %91 = vector.broadcast %27 : f32 to vector<1x128xf32>
    %92 = arith.mulf %91, %90 : vector<1x128xf32>
    %93 = arith.addf %80, %92 : vector<1x128xf32>
    %94 = vector.broadcast %4 : f32 to vector<1x128xf32>
    %95 = arith.mulf %94, %37 : vector<1x128xf32>
    %96 = vector.broadcast %12 : f32 to vector<1x128xf32>
    %97 = arith.mulf %96, %40 : vector<1x128xf32>
    %98 = arith.addf %95, %97 : vector<1x128xf32>
    %99 = vector.broadcast %20 : f32 to vector<1x128xf32>
    %100 = arith.addf %98, %99 : vector<1x128xf32>
    %cst_24 = arith.constant 0.00999999977 : f32
    %101 = vector.broadcast %cst_24 : f32 to vector<1x128xf32>
    %102 = arith.mulf %101, %100 : vector<1x128xf32>
    %103 = arith.maximumf %100, %102 : vector<1x128xf32>
    %104 = vector.broadcast %28 : f32 to vector<1x128xf32>
    %105 = arith.mulf %104, %103 : vector<1x128xf32>
    %106 = arith.addf %93, %105 : vector<1x128xf32>
    %107 = vector.broadcast %5 : f32 to vector<1x128xf32>
    %108 = arith.mulf %107, %37 : vector<1x128xf32>
    %109 = vector.broadcast %13 : f32 to vector<1x128xf32>
    %110 = arith.mulf %109, %40 : vector<1x128xf32>
    %111 = arith.addf %108, %110 : vector<1x128xf32>
    %112 = vector.broadcast %21 : f32 to vector<1x128xf32>
    %113 = arith.addf %111, %112 : vector<1x128xf32>
    %cst_25 = arith.constant 0.00999999977 : f32
    %114 = vector.broadcast %cst_25 : f32 to vector<1x128xf32>
    %115 = arith.mulf %114, %113 : vector<1x128xf32>
    %116 = arith.maximumf %113, %115 : vector<1x128xf32>
    %117 = vector.broadcast %29 : f32 to vector<1x128xf32>
    %118 = arith.mulf %117, %116 : vector<1x128xf32>
    %119 = arith.addf %106, %118 : vector<1x128xf32>
    %120 = vector.broadcast %6 : f32 to vector<1x128xf32>
    %121 = arith.mulf %120, %37 : vector<1x128xf32>
    %122 = vector.broadcast %14 : f32 to vector<1x128xf32>
    %123 = arith.mulf %122, %40 : vector<1x128xf32>
    %124 = arith.addf %121, %123 : vector<1x128xf32>
    %125 = vector.broadcast %22 : f32 to vector<1x128xf32>
    %126 = arith.addf %124, %125 : vector<1x128xf32>
    %cst_26 = arith.constant 0.00999999977 : f32
    %127 = vector.broadcast %cst_26 : f32 to vector<1x128xf32>
    %128 = arith.mulf %127, %126 : vector<1x128xf32>
    %129 = arith.maximumf %126, %128 : vector<1x128xf32>
    %130 = vector.broadcast %30 : f32 to vector<1x128xf32>
    %131 = arith.mulf %130, %129 : vector<1x128xf32>
    %132 = arith.addf %119, %131 : vector<1x128xf32>
    %133 = vector.broadcast %7 : f32 to vector<1x128xf32>
    %134 = arith.mulf %133, %37 : vector<1x128xf32>
    %135 = vector.broadcast %15 : f32 to vector<1x128xf32>
    %136 = arith.mulf %135, %40 : vector<1x128xf32>
    %137 = arith.addf %134, %136 : vector<1x128xf32>
    %138 = vector.broadcast %23 : f32 to vector<1x128xf32>
    %139 = arith.addf %137, %138 : vector<1x128xf32>
    %cst_27 = arith.constant 0.00999999977 : f32
    %140 = vector.broadcast %cst_27 : f32 to vector<1x128xf32>
    %141 = arith.mulf %140, %139 : vector<1x128xf32>
    %142 = arith.maximumf %139, %141 : vector<1x128xf32>
    %143 = vector.broadcast %31 : f32 to vector<1x128xf32>
    %144 = arith.mulf %143, %142 : vector<1x128xf32>
    %145 = arith.addf %132, %144 : vector<1x128xf32>
    %146 = math.exp %145 : vector<1x128xf32>
    %cst_28 = arith.constant 1.000000e+00 : f32
    %147 = vector.broadcast %cst_28 : f32 to vector<1x128xf32>
    %148 = arith.addf %147, %146 : vector<1x128xf32>
    %149 = tpu.reciprocal %148 {approx = true} : vector<1x128xf32> -> vector<1x128xf32>
    %150 = arith.index_cast %34 : i32 to index
    %c0_29 = arith.constant 0 : index
    %151 = vector.load %arg6[%150, %c0_29] : memref<1x128xf32, #tpu.memory_space<vmem>>, vector<1x128xf32>
    tpu.vector_store %arg6[%150, %c0_29], %149 {strides = array<i32>} : memref<1x128xf32, #tpu.memory_space<vmem>>, vector<1x128xf32>,
    %c1_i32_30 = arith.constant 1 : i32
    return
  }
  func.func @transform_0(%arg0: i32) -> (i32, i32, i32) {
    %c0_i32 = arith.constant 0 : i32
    %c0_i32_0 = arith.constant 0 : i32
    %c0_i32_1 = arith.constant 0 : i32
    return %c0_i32, %arg0, %c0_i32_0 : i32, i32, i32
  }
  func.func @transform_1(%arg0: i32) -> i32 {
    %c0_i32 = arith.constant 0 : i32
    %c0_i32_0 = arith.constant 0 : i32
    return %c0_i32 : i32
  }
  func.func @transform_2(%arg0: i32) -> i32 {
    %c0_i32 = arith.constant 0 : i32
    %c0_i32_0 = arith.constant 0 : i32
    return %c0_i32 : i32
  }
  func.func @transform_3(%arg0: i32) -> i32 {
    %c0_i32 = arith.constant 0 : i32
    %c0_i32_0 = arith.constant 0 : i32
    return %c0_i32 : i32
  }
  func.func @transform_4(%arg0: i32) -> i32 {
    %c0_i32 = arith.constant 0 : i32
    %c0_i32_0 = arith.constant 0 : i32
    return %c0_i32 : i32
  }
  func.func @transform_5(%arg0: i32) -> (i32, i32) {
    %c0_i32 = arith.constant 0 : i32
    %c0_i32_0 = arith.constant 0 : i32
    return %arg0, %c0_i32 : i32, i32
  }
}

</mosaic_0001>

<llo_original>
// kernel: tpu_custom_call.1
$region0: #{tpu_custom_call.1}
  #allocation0 [shape = 'u32[]', space=smem, size = 0x4, offset = 0x4, fixed_abs, tag = 'smem constant byte address 0x4 - core index']
  #allocation1 [shape = 'u32[144,128]{1,0:T(1,128)}', space=vmem, size = 0x12000, scoped, tag = 'internal scratch']
  #allocation2 [shape = 'f32[1]{0:T(128)S(6)}', space=smem, size = 0x200, scoped, tag = 'scoped memory for tpu_custom_call.1']
  %s0 = inlined_call_operand.vmem [shape: f32[2,1,128], index: 0, kind: input, shape index: {}]
  %s1 = inlined_call_operand.vmem [shape: f32[16], index: 1, kind: input, shape index: {}]
  %s2 = inlined_call_operand.vmem [shape: f32[8], index: 2, kind: input, shape index: {}]
  %s3 = inlined_call_operand.vmem [shape: f32[8], index: 3, kind: input, shape index: {}]
  %s4 = inlined_call_operand.<no memory space> [shape: f32[1], index: 4, kind: input, shape index: {}]
  %s5 = inlined_call_operand.hbm [shape: f32[1,128], index: 5, kind: output, shape index: {}]
  %s6 = sld [smem:[#allocation0]]
  $region42: #{tpu_custom_call.1} parent=0
    _
  %s8 = ssub.s32 1, %s6
  %s9 = scalar_select 0, %s8, %s6
  %10 = sst [smem:[#allocation2]] %s4
  $region1: #{tpu_custom_call.1} parent=0
    #allocation3 [shape = 'u8[512]{0}', space=smem, size = 0x200, scoped, tag = 'input window, operand 1, single buffered']
    #allocation4 [shape = 's32[1]{0}', space=sflag, size = 0x4, scoped, tag = 'scoped memory for tpu_custom_call.1']
    #allocation5 [shape = 's32[1]{0}', space=sflag, size = 0x4, scoped, tag = 'scoped memory for tpu_custom_call.1']
    #allocation6 [shape = 'u8[512]{0}', space=smem, size = 0x200, scoped, tag = 'input window, operand 2, single buffered']
    #allocation7 [shape = 's32[1]{0}', space=sflag, size = 0x4, scoped, tag = 'scoped memory for tpu_custom_call.1']
    #allocation8 [shape = 'u8[512]{0}', space=smem, size = 0x200, scoped, tag = 'input window, operand 3, single buffered']
    #allocation9 [shape = 'u8[512]{0}', space=vmem, size = 0x400, scoped, tag = 'output window, operand 0, single buffered']
    %11 = vsyncpa [#allocation5], 0
    %12 = vsyncpa [#allocation7], 0
    %13 = vsyncpa [#allocation4], 0
    // Predicated region
    $region2: #{tpu_custom_call.1} parent=1 // pred_check
      _
    $region3: #{tpu_custom_call.1} parent=1 // pred_check_branch
      %15 = sbr.rel (0) target = $region5
    $region4: #{tpu_custom_call.1} parent=1 // pred_region
      _
    $region5: #{tpu_custom_call.1} parent=1 // pred_fallthru
      _
    // Predicated region
    $region6: #{tpu_custom_call.1} parent=1 // pred_check
      _
    $region7: #{tpu_custom_call.1} parent=1 // pred_check_branch
      %17 = sbr.rel (0) target = $region9
    $region8: #{tpu_custom_call.1} parent=1 // pred_region
      %s19 = ssub.s32 16, 16
      %20 = vsyncadd [#allocation5], %s19
      %s22 = sshll.u32 %s1, 4
      %s23 = int_to_ptr.vmem [resolvable:$true] %s22
      %25 = dma.vmem_to_smem %s23, 16, [#allocation3], [#allocation5]
    $region9: #{tpu_custom_call.1} parent=1 // pred_fallthru
      _
    // Predicated region
    $region10: #{tpu_custom_call.1} parent=1 // pred_check
      _
    $region11: #{tpu_custom_call.1} parent=1 // pred_check_branch
      %27 = sbr.rel (0) target = $region13
    $region12: #{tpu_custom_call.1} parent=1 // pred_region
      %s29 = ssub.s32 16, 16
      %30 = vsyncadd [#allocation7], %s29
      %s32 = sshll.u32 %s2, 4
      %s33 = int_to_ptr.vmem [resolvable:$true] %s32
      %35 = dma.vmem_to_smem %s33, 16, [#allocation6], [#allocation7]
    $region13: #{tpu_custom_call.1} parent=1 // pred_fallthru
      _
    // Predicated region
    $region14: #{tpu_custom_call.1} parent=1 // pred_check
      _
    $region15: #{tpu_custom_call.1} parent=1 // pred_check_branch
      %37 = sbr.rel (0) target = $region17
    $region16: #{tpu_custom_call.1} parent=1 // pred_region
      %s39 = ssub.s32 16, 16
      %40 = vsyncadd [#allocation7], %s39
      %s42 = sshll.u32 %s3, 4
      %s43 = int_to_ptr.vmem [resolvable:$true] %s42
      %45 = dma.vmem_to_smem %s43, 16, [#allocation8], [#allocation7]
    $region17: #{tpu_custom_call.1} parent=1 // pred_fallthru
      _
    // Predicated region
    $region18: #{tpu_custom_call.1} parent=1 // pred_check
      _
    $region19: #{tpu_custom_call.1} parent=1 // pred_check_branch
      %47 = sbr.rel (0) target = $region21
    $region20: #{tpu_custom_call.1} parent=1 // pred_region
      _
    $region21: #{tpu_custom_call.1} parent=1 // pred_fallthru
      _
    // Predicated region
    $region22: #{tpu_custom_call.1} parent=1 // pred_check
      _
    $region23: #{tpu_custom_call.1} parent=1 // pred_check_branch
      %49 = sbr.rel (0) target = $region25
    $region24: #{tpu_custom_call.1} parent=1 // pred_region
      %50 = dma.done [#allocation5], 16
    $region25: #{tpu_custom_call.1} parent=1 // pred_fallthru
      _
    // Predicated region
    $region26: #{tpu_custom_call.1} parent=1 // pred_check
      _
    $region27: #{tpu_custom_call.1} parent=1 // pred_check_branch
      %52 = sbr.rel (0) target = $region29
    $region28: #{tpu_custom_call.1} parent=1 // pred_region
      %53 = dma.done [#allocation7], 16
    $region29: #{tpu_custom_call.1} parent=1 // pred_fallthru
      _
    // Predicated region
    $region30: #{tpu_custom_call.1} parent=1 // pred_check
      _
    $region31: #{tpu_custom_call.1} parent=1 // pred_check_branch
      %55 = sbr.rel (0) target = $region33
    $region32: #{tpu_custom_call.1} parent=1 // pred_region
      %56 = dma.done [#allocation7], 16
    $region33: #{tpu_custom_call.1} parent=1 // pred_fallthru
      _
    %57 = sfence
    %s58 = sld [smem:[#allocation3]]
    %s59 = sld [smem:[#allocation3 + $0x1]]
    %s60 = sld [smem:[#allocation3 + $0x2]]
    %s61 = sld [smem:[#allocation3 + $0x3]]
    %s62 = sld [smem:[#allocation3 + $0x4]]
    %s63 = sld [smem:[#allocation3 + $0x5]]
    %s64 = sld [smem:[#allocation3 + $0x6]]
    %s65 = sld [smem:[#allocation3 + $0x7]]
    %s66 = sld [smem:[#allocation3 + $0x8]]
    %s67 = sld [smem:[#allocation3 + $0x9]]
    %s68 = sld [smem:[#allocation3 + $0xa]]
    %s69 = sld [smem:[#allocation3 + $0xb]]
    %s70 = sld [smem:[#allocation3 + $0xc]]
    %s71 = sld [smem:[#allocation3 + $0xd]]
    %s72 = sld [smem:[#allocation3 + $0xe]]
    %s73 = sld [smem:[#allocation3 + $0xf]]
    %s74 = sld [smem:[#allocation6]]
    %s75 = sld [smem:[#allocation6 + $0x1]]
    %s76 = sld [smem:[#allocation6 + $0x2]]
    %s77 = sld [smem:[#allocation6 + $0x3]]
    %s78 = sld [smem:[#allocation6 + $0x4]]
    %s79 = sld [smem:[#allocation6 + $0x5]]
    %s80 = sld [smem:[#allocation6 + $0x6]]
    %s81 = sld [smem:[#allocation6 + $0x7]]
    %s82 = sld [smem:[#allocation8]]
    %s83 = sld [smem:[#allocation8 + $0x1]]
    %s84 = sld [smem:[#allocation8 + $0x2]]
    %s85 = sld [smem:[#allocation8 + $0x3]]
    %s86 = sld [smem:[#allocation8 + $0x4]]
    %s87 = sld [smem:[#allocation8 + $0x5]]
    %s88 = sld [smem:[#allocation8 + $0x6]]
    %s89 = sld [smem:[#allocation8 + $0x7]]
    %s90 = sld [smem:[#allocation2]]
    %v91 = vld [vmem:[%s0] sm:$0x1]
    %s92 = sadd.s32 0, 1
    %s93 = scalar_lea.vmem %s0, %s92
    %v94 = vld [vmem:[%s93] sm:$0x1]
    %v95 = vstv %s90
    %v96 = vstv %s58
    %v97 = vmul.f32 %v96, %v91
    %v98 = vstv %s66
    %v99 = vmul.f32 %v98, %v94
    %v100 = vadd.f32 %v97, %v99
    %v101 = vstv %s74
    %v102 = vadd.f32 %v100, %v101
    %v103 = vmul.f32 %v102, 0.01
    %v104 = vmax.f32 %v102, %v103
    %v105 = vstv %s82
    %v106 = vmul.f32 %v105, %v104
    %v107 = vadd.f32 %v95, %v106
    %v108 = vstv %s59
    %v109 = vmul.f32 %v108, %v91
    %v110 = vstv %s67
    %v111 = vmul.f32 %v110, %v94
    %v112 = vadd.f32 %v109, %v111
    %v113 = vstv %s75
    %v114 = vadd.f32 %v112, %v113
    %v115 = vmul.f32 %v114, 0.01
    %v116 = vmax.f32 %v114, %v115
    %v117 = vstv %s83
    %v118 = vmul.f32 %v117, %v116
    %v119 = vadd.f32 %v107, %v118
    %v120 = vstv %s60
    %v121 = vmul.f32 %v120, %v91
    %v122 = vstv %s68
    %v123 = vmul.f32 %v122, %v94
    %v124 = vadd.f32 %v121, %v123
    %v125 = vstv %s76
    %v126 = vadd.f32 %v124, %v125
    %v127 = vmul.f32 %v126, 0.01
    %v128 = vmax.f32 %v126, %v127
    %v129 = vstv %s84
    %v130 = vmul.f32 %v129, %v128
    %v131 = vadd.f32 %v119, %v130
    %v132 = vstv %s61
    %v133 = vmul.f32 %v132, %v91
    %v134 = vstv %s69
    %v135 = vmul.f32 %v134, %v94
    %v136 = vadd.f32 %v133, %v135
    %v137 = vstv %s77
    %v138 = vadd.f32 %v136, %v137
    %v139 = vmul.f32 %v138, 0.01
    %v140 = vmax.f32 %v138, %v139
    %v141 = vstv %s85
    %v142 = vmul.f32 %v141, %v140
    %v143 = vadd.f32 %v131, %v142
    %v144 = vstv %s62
    %v145 = vmul.f32 %v144, %v91
    %v146 = vstv %s70
    %v147 = vmul.f32 %v146, %v94
    %v148 = vadd.f32 %v145, %v147
    %v149 = vstv %s78
    %v150 = vadd.f32 %v148, %v149
    %v151 = vmul.f32 %v150, 0.01
    %v152 = vmax.f32 %v150, %v151
    %v153 = vstv %s86
    %v154 = vmul.f32 %v153, %v152
    %v155 = vadd.f32 %v143, %v154
    %v156 = vstv %s63
    %v157 = vmul.f32 %v156, %v91
    %v158 = vstv %s71
    %v159 = vmul.f32 %v158, %v94
    %v160 = vadd.f32 %v157, %v159
    %v161 = vstv %s79
    %v162 = vadd.f32 %v160, %v161
    %v163 = vmul.f32 %v162, 0.01
    %v164 = vmax.f32 %v162, %v163
    %v165 = vstv %s87
    %v166 = vmul.f32 %v165, %v164
    %v167 = vadd.f32 %v155, %v166
    %v168 = vstv %s64
    %v169 = vmul.f32 %v168, %v91
    %v170 = vstv %s72
    %v171 = vmul.f32 %v170, %v94
    %v172 = vadd.f32 %v169, %v171
    %v173 = vstv %s80
    %v174 = vadd.f32 %v172, %v173
    %v175 = vmul.f32 %v174, 0.01
    %v176 = vmax.f32 %v174, %v175
    %v177 = vstv %s88
    %v178 = vmul.f32 %v177, %v176
    %v179 = vadd.f32 %v167, %v178
    %v180 = vstv %s65
    %v181 = vmul.f32 %v180, %v91
    %v182 = vstv %s73
    %v183 = vmul.f32 %v182, %v94
    %v184 = vadd.f32 %v181, %v183
    %v185 = vstv %s81
    %v186 = vadd.f32 %v184, %v185
    %v187 = vmul.f32 %v186, 0.01
    %v188 = vmax.f32 %v186, %v187
    %v189 = vstv %s89
    %v190 = vmul.f32 %v189, %v188
    %v191 = vadd.f32 %v179, %v190
    %v192 = vmul.f32 %v191, 1.442695
    %v193 = vpow.pop %v192
    %v194 = vadd.f32 %v193, 1.0
    %v195 = vrcp.pop %v194
    %196 = vst [vmem:[#allocation9] sm:$0x1] %v195
    // Predicated region
    $region34: #{tpu_custom_call.1} parent=1 // pred_check
      _
    $region35: #{tpu_custom_call.1} parent=1 // pred_check_branch
      %198 = sbr.rel (0) target = $region37
    $region36: #{tpu_custom_call.1} parent=1 // pred_region
      %s200 = ssub.s32 16, 16
      %201 = vsyncadd [#allocation4], %s200
      %s203 = sshll.u32 [#allocation9], 4
      %s204 = int_to_ptr.vmem [resolvable:$true] %s203
      %206 = dma.vmem_to_hbm [thread:$0]  %s204, 16, %s5, [#allocation4]
    $region37: #{tpu_custom_call.1} parent=1 // pred_fallthru
      _
    // Predicated region
    $region38: #{tpu_custom_call.1} parent=1 // pred_check
      _
    $region39: #{tpu_custom_call.1} parent=1 // pred_check_branch
      %208 = sbr.rel (0) target = $region41
    $region40: #{tpu_custom_call.1} parent=1 // pred_region
      %209 = dma.done [#allocation4], 16
    $region41: #{tpu_custom_call.1} parent=1 // pred_fallthru
      _
    %210 = vsyncpa [#allocation4], 1
    %211 = vsyncpa [#allocation5], 1
    %212 = vsyncpa [#allocation7], 1

</llo_original>
